<compile_context>
chip_gen: v7x
topology: tpu7x:2x2x1
jax: 0.10.0
libtpu: 0.0.40
codegen_flags: <defaults>
</compile_context>

<pallas_src>
import jax
import jax.numpy as jnp
from jax.experimental import pallas as pl
from jax.experimental.pallas import tpu as pltpu

INPUT_SIZE = 28 * 28   # 784
OUTPUT_SIZE = 10

# Below this batch size a single fused XLA dot beats the pallas_call fixed
# cost (dispatch + a 1–2 step grid that cannot pipeline).
_SMALL_BATCH_FASTPATH = 1024


def _round_up(n, m):
    return ((n + m - 1) // m) * m


def _linear_kernel(x_ref, w_ref, b_ref, o_ref):
    # x_ref: [TM, 784]  w_ref: [784, 10]  b_ref: [1, 10]  o_ref: [TM, 10]
    acc = jnp.dot(x_ref[...], w_ref[...], preferred_element_type=jnp.float32)
    o_ref[...] = (acc + b_ref[...]).astype(o_ref.dtype)


def neural_network_forward(x, weight, bias, *, tm=4096, force_pallas=False):
    """x: [B, 1, 28, 28] float32 (NCHW).  weight: [10, 784], bias: [10]
    (PyTorch nn.Linear parameter shapes).  Returns [B, 10]."""
    B = x.shape[0]
    # nn.Flatten(): flatten all dims after batch (row-major) -> [B, 784]
    x_flat = x.reshape(B, -1)
    assert x_flat.shape[1] == INPUT_SIZE

    # Pre-transpose weight so the kernel is a straightforward [TM,784]@[784,10].
    w_t = weight.T                      # [784, 10]
    b2d = bias.reshape(1, OUTPUT_SIZE)  # [1, 10]

    # Small-batch fast path: XLA's fused dot is as fast or faster than a
    # 1–2 step pallas_call for tiny B, with zero effect on large-B throughput.
    if (not force_pallas) and B <= _SMALL_BATCH_FASTPATH:
        return x_flat @ w_t + bias

    # Batch tile selection:
    #  * multiple of 8 sublanes,
    #  * capped at `tm` (default 4096 -> ~25.7 MiB double-buffered x),
    #  * capped so the grid has >=2 steps whenever B allows it (v7x megacore
    #    sharding of the "parallel" axis + DMA/compute overlap).
    itemsize = jnp.dtype(x.dtype).itemsize
    half_b = max(_round_up(pl.cdiv(B, 2), 8), 8)
    tm_eff = max(min(tm, _round_up(B, 8), half_b), 8)
    grid = (pl.cdiv(B, tm_eff),)

    # Explicit scoped-VMEM budget: double-buffered x and out tiles, resident
    # weight/bias (single-buffered via pl.Buffered(1)), plus 1 MiB slack.
    vmem_bytes = (
        2 * tm_eff * INPUT_SIZE * itemsize        # x double buffer
        + 2 * tm_eff * OUTPUT_SIZE * itemsize     # out double buffer
        + INPUT_SIZE * OUTPUT_SIZE * itemsize     # resident weight
        + OUTPUT_SIZE * itemsize                  # resident bias
        + (1 << 20)                               # slack
    )
    vmem_limit = int(min(max(vmem_bytes, 16 << 20), 64 << 20))

    cost = pl.CostEstimate(
        flops=2 * B * INPUT_SIZE * OUTPUT_SIZE,
        transcendentals=0,
        bytes_accessed=(B * INPUT_SIZE + INPUT_SIZE * OUTPUT_SIZE
                        + OUTPUT_SIZE + B * OUTPUT_SIZE) * itemsize,
    )

    out = pl.pallas_call(
        _linear_kernel,
        out_shape=jax.ShapeDtypeStruct((B, OUTPUT_SIZE), x.dtype),
        grid_spec=pltpu.PrefetchScalarGridSpec(
            num_scalar_prefetch=0,
            grid=grid,
            in_specs=[
                # x: one batch tile per grid step (pipelined DMA).
                pl.BlockSpec((tm_eff, INPUT_SIZE), lambda i: (i, 0)),
                # weight / bias: resident across the whole grid, constant
                # index_map -> single buffer is enough.
                pl.BlockSpec((INPUT_SIZE, OUTPUT_SIZE), lambda i: (0, 0),
                             pipeline_mode=pl.Buffered(1)),
                pl.BlockSpec((1, OUTPUT_SIZE), lambda i: (0, 0),
                             pipeline_mode=pl.Buffered(1)),
            ],
            out_specs=pl.BlockSpec((tm_eff, OUTPUT_SIZE), lambda i: (i, 0)),
        ),
        compiler_params=pltpu.CompilerParams(
            dimension_semantics=("parallel",),   # megacore sharding on v7x
            vmem_limit_bytes=vmem_limit,
        ),
        cost_estimate=cost,
    )(x_flat, w_t, b2d)
    return out


def init_params(key):
    """Deterministic parameter init matching nn.Linear(784, 10) shapes
    (uniform(-1/sqrt(fan_in), 1/sqrt(fan_in)), like PyTorch's default)."""
    kw, kb = jax.random.split(key)
    bound = 1.0 / jnp.sqrt(jnp.float32(INPUT_SIZE))
    weight = jax.random.uniform(kw, (OUTPUT_SIZE, INPUT_SIZE),
                                jnp.float32, -bound, bound)
    bias = jax.random.uniform(kb, (OUTPUT_SIZE,), jnp.float32, -bound, bound)
    return weight, bias


if __name__ == "__main__":
    key = jax.random.PRNGKey(0)
    k_x, k_p = jax.random.split(key)
    weight, bias = init_params(k_p)

    # Small-shape check (batch=2): force the Pallas path so the kernel runs.
    B = 2
    x = jax.random.normal(k_x, (B, 1, 28, 28), jnp.float32)   # NCHW
    y = jax.block_until_ready(
        neural_network_forward(x, weight, bias, force_pallas=True))
    y_ref = x.reshape(B, -1) @ weight.T + bias
    assert y.shape == (B, OUTPUT_SIZE)
    assert jnp.allclose(y, y_ref, atol=1e-4, rtol=1e-4)

    # Small-batch XLA fast path (wrapper-level) also matches the reference.
    y_fast = jax.block_until_ready(neural_network_forward(x, weight, bias))
    assert jnp.allclose(y_fast, y_ref, atol=1e-4, rtol=1e-4)

    # Multi-tile check: exercises grid > 1, the >=2-step cap, and a ragged
    # last batch tile, still at small shapes.
    B2 = 40
    x2 = jax.random.normal(k_x, (B2, 1, 28, 28), jnp.float32)
    y2 = jax.block_until_ready(
        neural_network_forward(x2, weight, bias, tm=16, force_pallas=True))
    y2_ref = x2.reshape(B2, -1) @ weight.T + bias
    assert y2.shape == (B2, OUTPUT_SIZE)
    assert jnp.allclose(y2, y2_ref, atol=1e-4, rtol=1e-4)

    print("KERNEL_OK")
</pallas_src>

<mosaic_0001>
module attributes {stable_mosaic.version = 11 : i64} {
  func.func @_linear_kernel(%arg0: i32, %arg1: memref<8x784xf32, #tpu.memory_space<vmem>>, %arg2: memref<784x10xf32, #tpu.memory_space<vmem>>, %arg3: memref<1x10xf32, #tpu.memory_space<vmem>>, %arg4: memref<8x10xf32, #tpu.memory_space<vmem>>) attributes {dimension_semantics = [#tpu.dimension_semantics<parallel>], iteration_bounds = array<i64: 1>, scalar_prefetch = 0 : i64, scratch_operands = 0 : i64, tpu.core_type = #tpu.core_type<tc>, window_params = [{transform_indices = @transform_0, window_bounds = array<i64: 8, 784>}, {pipeline_mode = #tpu.pipeline_mode<synchronous>, transform_indices = @transform_1, window_bounds = array<i64: 784, 10>}, {pipeline_mode = #tpu.pipeline_mode<synchronous>, transform_indices = @transform_2, window_bounds = array<i64: 1, 10>}, {transform_indices = @transform_3, window_bounds = array<i64: 8, 10>}]} {
    %c0 = arith.constant 0 : index
    %c0_0 = arith.constant 0 : index
    %0 = vector.load %arg1[%c0, %c0_0] : memref<8x784xf32, #tpu.memory_space<vmem>>, vector<8x784xf32>
    %c0_1 = arith.constant 0 : index
    %c0_2 = arith.constant 0 : index
    %1 = vector.load %arg2[%c0_1, %c0_2] : memref<784x10xf32, #tpu.memory_space<vmem>>, vector<784x10xf32>
    %cst = arith.constant dense<0.000000e+00> : vector<8x10xf32>
    %2 = tpu.matmul %0, %1, %cst {dimension_numbers = #tpu.dot_dimension_numbers<[1], [0], [0], [1], [0, 0, 1, 1], [], []>} : vector<8x784xf32>, vector<784x10xf32>, vector<8x10xf32> -> vector<8x10xf32>
    %c0_3 = arith.constant 0 : index
    %c0_4 = arith.constant 0 : index
    %3 = vector.load %arg3[%c0_3, %c0_4] : memref<1x10xf32, #tpu.memory_space<vmem>>, vector<1x10xf32>
    %4 = vector.broadcast %3 : vector<1x10xf32> to vector<8x10xf32>
    %5 = arith.addf %2, %4 : vector<8x10xf32>
    %c0_5 = arith.constant 0 : index
    %c0_6 = arith.constant 0 : index
    %6 = vector.load %arg4[%c0_5, %c0_6] : memref<8x10xf32, #tpu.memory_space<vmem>>, vector<8x10xf32>
    tpu.vector_store %arg4[%c0_5, %c0_6], %5 {strides = array<i32>} : memref<8x10xf32, #tpu.memory_space<vmem>>, vector<8x10xf32>,
    return
  }
  func.func @transform_0(%arg0: i32) -> (i32, i32) {
    %c0_i32 = arith.constant 0 : i32
    %c0_i32_0 = arith.constant 0 : i32
    return %arg0, %c0_i32 : i32, i32
  }
  func.func @transform_1(%arg0: i32) -> (i32, i32) {
    %c0_i32 = arith.constant 0 : i32
    %c0_i32_0 = arith.constant 0 : i32
    %c0_i32_1 = arith.constant 0 : i32
    return %c0_i32, %c0_i32_0 : i32, i32
  }
  func.func @transform_2(%arg0: i32) -> (i32, i32) {
    %c0_i32 = arith.constant 0 : i32
    %c0_i32_0 = arith.constant 0 : i32
    %c0_i32_1 = arith.constant 0 : i32
    return %c0_i32, %c0_i32_0 : i32, i32
  }
  func.func @transform_3(%arg0: i32) -> (i32, i32) {
    %c0_i32 = arith.constant 0 : i32
    %c0_i32_0 = arith.constant 0 : i32
    return %arg0, %c0_i32 : i32, i32
  }
}

</mosaic_0001>

<llo_original>
// kernel: tpu_custom_call.1
$region0: #{tpu_custom_call.1}
  #allocation0 [shape = 'u32[]', space=smem, size = 0x4, offset = 0x4, fixed_abs, tag = 'smem constant byte address 0x4 - core index']
  #allocation1 [shape = 'u32[144,128]{1,0:T(1,128)}', space=vmem, size = 0x12000, scoped, tag = 'internal scratch']
  %s0 = inlined_call_operand.vmem [shape: f32[2,784], index: 0, kind: input, shape index: {}]
  %s1 = inlined_call_operand.vmem [shape: f32[784,10], index: 1, kind: input, shape index: {}]
  %s2 = inlined_call_operand.vmem [shape: f32[1,10], index: 2, kind: input, shape index: {}]
  %s3 = inlined_call_operand.hbm [shape: f32[2,10], index: 3, kind: output, shape index: {}]
  %s4 = sld [smem:[#allocation0]]
  $region22: #{tpu_custom_call.1} parent=0
    _
  %s6 = ssub.s32 1, %s4
  %s7 = scalar_select 0, %s6, %s4
  $region1: #{tpu_custom_call.1} parent=0
    #allocation2 [shape = 'u8[4096]{0}', space=vmem, size = 0x1000, scoped, tag = 'output window, operand 0, single buffered']
    #allocation3 [shape = 's32[1]{0}', space=sflag, size = 0x4, scoped, tag = 'scoped memory for tpu_custom_call.1']
    %8 = vsyncpa [#allocation3], 0
    // Predicated region
    $region2: #{tpu_custom_call.1} parent=1 // pred_check
      _
    $region3: #{tpu_custom_call.1} parent=1 // pred_check_branch
      %10 = sbr.rel (0) target = $region5
    $region4: #{tpu_custom_call.1} parent=1 // pred_region
      _
    $region5: #{tpu_custom_call.1} parent=1 // pred_fallthru
      _
    // Predicated region
    $region6: #{tpu_custom_call.1} parent=1 // pred_check
      _
    $region7: #{tpu_custom_call.1} parent=1 // pred_check_branch
      %12 = sbr.rel (0) target = $region9
    $region8: #{tpu_custom_call.1} parent=1 // pred_region
      _
    $region9: #{tpu_custom_call.1} parent=1 // pred_fallthru
      _
    // Predicated region
    $region10: #{tpu_custom_call.1} parent=1 // pred_check
      _
    $region11: #{tpu_custom_call.1} parent=1 // pred_check_branch
      %14 = sbr.rel (0) target = $region13
    $region12: #{tpu_custom_call.1} parent=1 // pred_region
      _
    $region13: #{tpu_custom_call.1} parent=1 // pred_fallthru
      _
    %v15 = vld [vmem:[%s0] sm:$0xff]
    %v16 = vld [vmem:[%s0 + $0x8] sm:$0x3f]
    %v17 = vld [vmem:[%s0 + $0xe] sm:$0xff]
    %v18 = vld [vmem:[%s0 + $0x16] sm:$0x3f]
    %v19 = vld [vmem:[%s0 + $0x1c] sm:$0xff]
    %v20 = vld [vmem:[%s0 + $0x24] sm:$0x3f]
    %v21 = vld [vmem:[%s0 + $0x2a] sm:$0xff]
    %v22 = vld [vmem:[%s0 + $0x32] sm:$0x3f]
    %v23 = vld [vmem:[%s1] sm:$0xff]
    %v24 = vld [vmem:[%s1 + $0x8] sm:$0xff]
    %v25 = vld [vmem:[%s1 + $0x10] sm:$0xff]
    %v26 = vld [vmem:[%s1 + $0x18] sm:$0xff]
    %v27 = vld [vmem:[%s1 + $0x20] sm:$0xff]
    %v28 = vld [vmem:[%s1 + $0x28] sm:$0xff]
    %v29 = vld [vmem:[%s1 + $0x30] sm:$0xff]
    %v30 = vld [vmem:[%s1 + $0x38] sm:$0xff]
    %v31 = vld [vmem:[%s1 + $0x40] sm:$0xff]
    %v32 = vld [vmem:[%s1 + $0x48] sm:$0xff]
    %v33 = vld [vmem:[%s1 + $0x50] sm:$0xff]
    %v34 = vld [vmem:[%s1 + $0x58] sm:$0xff]
    %v35 = vld [vmem:[%s1 + $0x60] sm:$0xff]
    %v36 = vld [vmem:[%s1 + $0x68] sm:$0xff]
    %v37 = vld [vmem:[%s1 + $0x70] sm:$0xff]
    %v38 = vld [vmem:[%s1 + $0x78] sm:$0xff]
    %v39 = vld [vmem:[%s1 + $0x80] sm:$0xff]
    %v40 = vld [vmem:[%s1 + $0x88] sm:$0xff]
    %v41 = vld [vmem:[%s1 + $0x90] sm:$0xff]
    %v42 = vld [vmem:[%s1 + $0x98] sm:$0xff]
    %v43 = vld [vmem:[%s1 + $0xa0] sm:$0xff]
    %v44 = vld [vmem:[%s1 + $0xa8] sm:$0xff]
    %v45 = vld [vmem:[%s1 + $0xb0] sm:$0xff]
    %v46 = vld [vmem:[%s1 + $0xb8] sm:$0xff]
    %v47 = vld [vmem:[%s1 + $0xc0] sm:$0xff]
    %v48 = vld [vmem:[%s1 + $0xc8] sm:$0xff]
    %v49 = vld [vmem:[%s1 + $0xd0] sm:$0xff]
    %v50 = vld [vmem:[%s1 + $0xd8] sm:$0xff]
    %v51 = vld [vmem:[%s1 + $0xe0] sm:$0xff]
    %v52 = vld [vmem:[%s1 + $0xe8] sm:$0xff]
    %v53 = vld [vmem:[%s1 + $0xf0] sm:$0xff]
    %v54 = vld [vmem:[%s1 + $0xf8] sm:$0xff]
    %v55 = vld [vmem:[%s1 + $0x100] sm:$0xff]
    %v56 = vld [vmem:[%s1 + $0x108] sm:$0xff]
    %v57 = vld [vmem:[%s1 + $0x110] sm:$0xff]
    %v58 = vld [vmem:[%s1 + $0x118] sm:$0xff]
    %v59 = vld [vmem:[%s1 + $0x120] sm:$0xff]
    %v60 = vld [vmem:[%s1 + $0x128] sm:$0xff]
    %v61 = vld [vmem:[%s1 + $0x130] sm:$0xff]
    %v62 = vld [vmem:[%s1 + $0x138] sm:$0xff]
    %v63 = vld [vmem:[%s1 + $0x140] sm:$0xff]
    %v64 = vld [vmem:[%s1 + $0x148] sm:$0xff]
    %v65 = vld [vmem:[%s1 + $0x150] sm:$0xff]
    %v66 = vld [vmem:[%s1 + $0x158] sm:$0xff]
    %v67 = vld [vmem:[%s1 + $0x160] sm:$0xff]
    %v68 = vld [vmem:[%s1 + $0x168] sm:$0xff]
    %v69 = vld [vmem:[%s1 + $0x170] sm:$0xff]
    %v70 = vld [vmem:[%s1 + $0x178] sm:$0xff]
    %v71 = vld [vmem:[%s1 + $0x180] sm:$0xff]
    %v72 = vld [vmem:[%s1 + $0x188] sm:$0xff]
    %v73 = vld [vmem:[%s1 + $0x190] sm:$0xff]
    %v74 = vld [vmem:[%s1 + $0x198] sm:$0xff]
    %v75 = vld [vmem:[%s1 + $0x1a0] sm:$0xff]
    %v76 = vld [vmem:[%s1 + $0x1a8] sm:$0xff]
    %v77 = vld [vmem:[%s1 + $0x1b0] sm:$0xff]
    %v78 = vld [vmem:[%s1 + $0x1b8] sm:$0xff]
    %v79 = vld [vmem:[%s1 + $0x1c0] sm:$0xff]
    %v80 = vld [vmem:[%s1 + $0x1c8] sm:$0xff]
    %v81 = vld [vmem:[%s1 + $0x1d0] sm:$0xff]
    %v82 = vld [vmem:[%s1 + $0x1d8] sm:$0xff]
    %v83 = vld [vmem:[%s1 + $0x1e0] sm:$0xff]
    %v84 = vld [vmem:[%s1 + $0x1e8] sm:$0xff]
    %v85 = vld [vmem:[%s1 + $0x1f0] sm:$0xff]
    %v86 = vld [vmem:[%s1 + $0x1f8] sm:$0xff]
    %v87 = vld [vmem:[%s1 + $0x200] sm:$0xff]
    %v88 = vld [vmem:[%s1 + $0x208] sm:$0xff]
    %v89 = vld [vmem:[%s1 + $0x210] sm:$0xff]
    %v90 = vld [vmem:[%s1 + $0x218] sm:$0xff]
    %v91 = vld [vmem:[%s1 + $0x220] sm:$0xff]
    %v92 = vld [vmem:[%s1 + $0x228] sm:$0xff]
    %v93 = vld [vmem:[%s1 + $0x230] sm:$0xff]
    %v94 = vld [vmem:[%s1 + $0x238] sm:$0xff]
    %v95 = vld [vmem:[%s1 + $0x240] sm:$0xff]
    %v96 = vld [vmem:[%s1 + $0x248] sm:$0xff]
    %v97 = vld [vmem:[%s1 + $0x250] sm:$0xff]
    %v98 = vld [vmem:[%s1 + $0x258] sm:$0xff]
    %v99 = vld [vmem:[%s1 + $0x260] sm:$0xff]
    %v100 = vld [vmem:[%s1 + $0x268] sm:$0xff]
    %v101 = vld [vmem:[%s1 + $0x270] sm:$0xff]
    %v102 = vld [vmem:[%s1 + $0x278] sm:$0xff]
    %v103 = vld [vmem:[%s1 + $0x280] sm:$0xff]
    %v104 = vld [vmem:[%s1 + $0x288] sm:$0xff]
    %v105 = vld [vmem:[%s1 + $0x290] sm:$0xff]
    %v106 = vld [vmem:[%s1 + $0x298] sm:$0xff]
    %v107 = vld [vmem:[%s1 + $0x2a0] sm:$0xff]
    %v108 = vld [vmem:[%s1 + $0x2a8] sm:$0xff]
    %v109 = vld [vmem:[%s1 + $0x2b0] sm:$0xff]
    %v110 = vld [vmem:[%s1 + $0x2b8] sm:$0xff]
    %v111 = vld [vmem:[%s1 + $0x2c0] sm:$0xff]
    %v112 = vld [vmem:[%s1 + $0x2c8] sm:$0xff]
    %v113 = vld [vmem:[%s1 + $0x2d0] sm:$0xff]
    %v114 = vld [vmem:[%s1 + $0x2d8] sm:$0xff]
    %v115 = vld [vmem:[%s1 + $0x2e0] sm:$0xff]
    %v116 = vld [vmem:[%s1 + $0x2e8] sm:$0xff]
    %v117 = vld [vmem:[%s1 + $0x2f0] sm:$0xff]
    %v118 = vld [vmem:[%s1 + $0x2f8] sm:$0xff]
    %v119 = vld [vmem:[%s1 + $0x300] sm:$0xff]
    %v120 = vld [vmem:[%s1 + $0x308] sm:$0xff]
    %v121 = vld [vmem:[%s2] sm:$0x1]
    %v123 = vlaneseq
    %v124 = vshrl.u32 %v123, 7
    %v125 = vsub.s32 0, %v124
    %v126 = vrot.slane %v121, %v125
    %v136 = vcombine.low %v15, %v17
    %v137 = vcombine.high %v15, %v17
    %v138 = vcombine.low %v19, %v21
    %v139 = vcombine.high %v19, %v21
    %v141 = vunpack.c.l.s4 1983009808
    %v142 = vunpack.c.0.s8 %v141
    %v143 = vlaneseq
    %v144 = vshrl.u32 %v143, 7
    %v145 = vsub.s32 %v142, %v144
    %v146 = vrot.slane %v136, %v145
    %v148 = vunpack.c.l.s4 1983009808
    %v149 = vunpack.c.0.s8 %v148
    %v150 = vlaneseq
    %v151 = vshrl.u32 %v150, 7
    %v152 = vsub.s32 %v149, %v151
    %v153 = vrot.slane %v137, %v152
    %v155 = vunpack.c.l.s4 1983009808
    %v156 = vunpack.c.0.s8 %v155
    %v157 = vlaneseq
    %v158 = vshrl.u32 %v157, 7
    %v159 = vsub.s32 %v156, %v158
    %v160 = vrot.slane %v138, %v159
    %v162 = vunpack.c.l.s4 1983009808
    %v163 = vunpack.c.0.s8 %v162
    %v164 = vlaneseq
    %v165 = vshrl.u32 %v164, 7
    %v166 = vsub.s32 %v163, %v165
    %v167 = vrot.slane %v139, %v166
    %v168 = vcombine.low %v146, %v160
    %v169 = vcombine.high %v146, %v160
    %v170 = vcombine.low %v153, %v167
    %v171 = vcombine.high %v153, %v167
    %v172 = vcombine.low %v16, %v18
    %v173 = vcombine.high %v16, %v18
    %v174 = vcombine.low %v20, %v22
    %v175 = vcombine.high %v20, %v22
    %v177 = vunpack.c.l.s4 1983009808
    %v178 = vunpack.c.0.s8 %v177
    %v179 = vlaneseq
    %v180 = vshrl.u32 %v179, 7
    %v181 = vsub.s32 %v178, %v180
    %v182 = vrot.slane %v172, %v181
    %v184 = vunpack.c.l.s4 1983009808
    %v185 = vunpack.c.0.s8 %v184
    %v186 = vlaneseq
    %v187 = vshrl.u32 %v186, 7
    %v188 = vsub.s32 %v185, %v187
    %v189 = vrot.slane %v173, %v188
    %v191 = vunpack.c.l.s4 1983009808
    %v192 = vunpack.c.0.s8 %v191
    %v193 = vlaneseq
    %v194 = vshrl.u32 %v193, 7
    %v195 = vsub.s32 %v192, %v194
    %v196 = vrot.slane %v174, %v195
    %v198 = vunpack.c.l.s4 1983009808
    %v199 = vunpack.c.0.s8 %v198
    %v200 = vlaneseq
    %v201 = vshrl.u32 %v200, 7
    %v202 = vsub.s32 %v199, %v201
    %v203 = vrot.slane %v175, %v202
    %v204 = vcombine.low %v182, %v196
    %v205 = vcombine.high %v182, %v196
    %v206 = vcombine.low %v189, %v203
    %vm213 = vcmask 130048
    %v214 = vsel %vm213, %v206, 0
    %216 = vmatprep.subr.mxu0 0.0
    %217 = vmatpush1.msra.mxu0 %v23
    %218 = vmatprep.subr.mxu0 0.0
    %219 = vmatpush1.msra.mxu0 %v24
    %220 = vmatprep.subr.mxu0 0.0
    %221 = vmatpush1.msra.mxu0 %v25
    %222 = vmatprep.subr.mxu0 0.0
    %223 = vmatpush1.msra.mxu0 %v26
    %224 = vmatprep.subr.mxu0 0.0
    %225 = vmatpush1.msra.mxu0 %v27
    %226 = vmatprep.subr.mxu0 0.0
    %227 = vmatpush1.msra.mxu0 %v28
    %228 = vmatprep.subr.mxu0 0.0
    %229 = vmatpush1.msra.mxu0 %v29
    %230 = vmatprep.subr.mxu0 0.0
    %231 = vmatpush1.msra.mxu0 %v30
    %232 = vmatprep.subr.mxu0 0.0
    %233 = vmatpush1.msra.mxu0 %v31
    %234 = vmatprep.subr.mxu0 0.0
    %235 = vmatpush1.msra.mxu0 %v32
    %236 = vmatprep.subr.mxu0 0.0
    %237 = vmatpush1.msra.mxu0 %v33
    %238 = vmatprep.subr.mxu0 0.0
    %239 = vmatpush1.msra.mxu0 %v34
    %240 = vmatprep.subr.mxu0 0.0
    %241 = vmatpush1.msra.mxu0 %v35
    %242 = vmatprep.subr.mxu0 0.0
    %243 = vmatpush1.msra.mxu0 %v36
    %244 = vmatprep.subr.mxu0 0.0
    %245 = vmatpush1.msra.mxu0 %v37
    %246 = vmatprep.subr.mxu0 0.0
    %247 = vmatpush1.msra.mxu0 %v38
    %248 = vmatprep.subr.mxu0 0.0
    %249 = vmatpush1.msra.mxu0 %v39
    %250 = vmatprep.subr.mxu0 0.0
    %251 = vmatpush1.msra.mxu0 %v40
    %252 = vmatprep.subr.mxu0 0.0
    %253 = vmatpush1.msra.mxu0 %v41
    %254 = vmatprep.subr.mxu0 0.0
    %255 = vmatpush1.msra.mxu0 %v42
    %256 = vmatprep.subr.mxu0 0.0
    %257 = vmatpush1.msra.mxu0 %v43
    %258 = vmatprep.subr.mxu0 0.0
    %259 = vmatpush1.msra.mxu0 %v44
    %260 = vmatprep.subr.mxu0 0.0
    %261 = vmatpush1.msra.mxu0 %v45
    %262 = vmatprep.subr.mxu0 0.0
    %263 = vmatpush1.msra.mxu0 %v46
    %264 = vmatprep.subr.mxu0 0.0
    %265 = vmatpush1.msra.mxu0 %v47
    %266 = vmatprep.subr.mxu0 0.0
    %267 = vmatpush1.msra.mxu0 %v48
    %268 = vmatprep.subr.mxu0 0.0
    %269 = vmatpush1.msra.mxu0 %v49
    %270 = vmatprep.subr.mxu0 0.0
    %271 = vmatpush1.msra.mxu0 %v50
    %272 = vmatprep.subr.mxu0 0.0
    %273 = vmatpush1.msra.mxu0 %v51
    %274 = vmatprep.subr.mxu0 0.0
    %275 = vmatpush1.msra.mxu0 %v52
    %276 = vmatprep.subr.mxu0 0.0
    %277 = vmatpush1.msra.mxu0 %v53
    %278 = vmatprep.subr.mxu0 0.0
    %279 = vmatpush1.msra.mxu0 %v54
    %280 = vmatprep.mubr.f32.mxu0 %v169
    %281 = vmatmul.mubr.f32.gmra.mrb[0].mxu0 %v168
    %v282 = vpop.f32.mrb[0].mxu0
    %v283 = vadd.f32 %v126, %v282
    %v284 = vpop.f32.mrb[0].mxu0
    %285 = vdwg.mxu0
    %286 = vmatprep.subr.mxu0 0.0
    %287 = vmatpush1.msra.mxu0 %v55
    %288 = vmatprep.subr.mxu0 0.0
    %289 = vmatpush1.msra.mxu0 %v56
    %290 = vmatprep.subr.mxu0 0.0
    %291 = vmatpush1.msra.mxu0 %v57
    %292 = vmatprep.subr.mxu0 0.0
    %293 = vmatpush1.msra.mxu0 %v58
    %294 = vmatprep.subr.mxu0 0.0
    %295 = vmatpush1.msra.mxu0 %v59
    %296 = vmatprep.subr.mxu0 0.0
    %297 = vmatpush1.msra.mxu0 %v60
    %298 = vmatprep.subr.mxu0 0.0
    %299 = vmatpush1.msra.mxu0 %v61
    %300 = vmatprep.subr.mxu0 0.0
    %301 = vmatpush1.msra.mxu0 %v62
    %302 = vmatprep.subr.mxu0 0.0
    %303 = vmatpush1.msra.mxu0 %v63
    %304 = vmatprep.subr.mxu0 0.0
    %305 = vmatpush1.msra.mxu0 %v64
    %306 = vmatprep.subr.mxu0 0.0
    %307 = vmatpush1.msra.mxu0 %v65
    %308 = vmatprep.subr.mxu0 0.0
    %309 = vmatpush1.msra.mxu0 %v66
    %310 = vmatprep.subr.mxu0 0.0
    %311 = vmatpush1.msra.mxu0 %v67
    %312 = vmatprep.subr.mxu0 0.0
    %313 = vmatpush1.msra.mxu0 %v68
    %314 = vmatprep.subr.mxu0 0.0
    %315 = vmatpush1.msra.mxu0 %v69
    %316 = vmatprep.subr.mxu0 0.0
    %317 = vmatpush1.msra.mxu0 %v70
    %318 = vmatprep.subr.mxu0 0.0
    %319 = vmatpush1.msra.mxu0 %v71
    %320 = vmatprep.subr.mxu0 0.0
    %321 = vmatpush1.msra.mxu0 %v72
    %322 = vmatprep.subr.mxu0 0.0
    %323 = vmatpush1.msra.mxu0 %v73
    %324 = vmatprep.subr.mxu0 0.0
    %325 = vmatpush1.msra.mxu0 %v74
    %326 = vmatprep.subr.mxu0 0.0
    %327 = vmatpush1.msra.mxu0 %v75
    %328 = vmatprep.subr.mxu0 0.0
    %329 = vmatpush1.msra.mxu0 %v76
    %330 = vmatprep.subr.mxu0 0.0
    %331 = vmatpush1.msra.mxu0 %v77
    %332 = vmatprep.subr.mxu0 0.0
    %333 = vmatpush1.msra.mxu0 %v78
    %334 = vmatprep.subr.mxu0 0.0
    %335 = vmatpush1.msra.mxu0 %v79
    %336 = vmatprep.subr.mxu0 0.0
    %337 = vmatpush1.msra.mxu0 %v80
    %338 = vmatprep.subr.mxu0 0.0
    %339 = vmatpush1.msra.mxu0 %v81
    %340 = vmatprep.subr.mxu0 0.0
    %341 = vmatpush1.msra.mxu0 %v82
    %342 = vmatprep.subr.mxu0 0.0
    %343 = vmatpush1.msra.mxu0 %v83
    %344 = vmatprep.subr.mxu0 0.0
    %345 = vmatpush1.msra.mxu0 %v84
    %346 = vmatprep.subr.mxu0 0.0
    %347 = vmatpush1.msra.mxu0 %v85
    %348 = vmatprep.subr.mxu0 0.0
    %349 = vmatpush1.msra.mxu0 %v86
    %350 = vmatprep.mubr.f32.mxu0 %v171
    %351 = vmatmul.mubr.f32.gmra.mrb[0].mxu0 %v170
    %v352 = vpop.f32.mrb[0].mxu0
    %v353 = vadd.f32 %v283, %v352
    %v354 = vpop.f32.mrb[0].mxu0
    %355 = vdwg.mxu0
    %356 = vmatprep.subr.mxu0 0.0
    %357 = vmatpush1.msra.mxu0 %v87
    %358 = vmatprep.subr.mxu0 0.0
    %359 = vmatpush1.msra.mxu0 %v88
    %360 = vmatprep.subr.mxu0 0.0
    %361 = vmatpush1.msra.mxu0 %v89
    %362 = vmatprep.subr.mxu0 0.0
    %363 = vmatpush1.msra.mxu0 %v90
    %364 = vmatprep.subr.mxu0 0.0
    %365 = vmatpush1.msra.mxu0 %v91
    %366 = vmatprep.subr.mxu0 0.0
    %367 = vmatpush1.msra.mxu0 %v92
    %368 = vmatprep.subr.mxu0 0.0
    %369 = vmatpush1.msra.mxu0 %v93
    %370 = vmatprep.subr.mxu0 0.0
    %371 = vmatpush1.msra.mxu0 %v94
    %372 = vmatprep.subr.mxu0 0.0
    %373 = vmatpush1.msra.mxu0 %v95
    %374 = vmatprep.subr.mxu0 0.0
    %375 = vmatpush1.msra.mxu0 %v96
    %376 = vmatprep.subr.mxu0 0.0
    %377 = vmatpush1.msra.mxu0 %v97
    %378 = vmatprep.subr.mxu0 0.0
    %379 = vmatpush1.msra.mxu0 %v98
    %380 = vmatprep.subr.mxu0 0.0
    %381 = vmatpush1.msra.mxu0 %v99
    %382 = vmatprep.subr.mxu0 0.0
    %383 = vmatpush1.msra.mxu0 %v100
    %384 = vmatprep.subr.mxu0 0.0
    %385 = vmatpush1.msra.mxu0 %v101
    %386 = vmatprep.subr.mxu0 0.0
    %387 = vmatpush1.msra.mxu0 %v102
    %388 = vmatprep.subr.mxu0 0.0
    %389 = vmatpush1.msra.mxu0 %v103
    %390 = vmatprep.subr.mxu0 0.0
    %391 = vmatpush1.msra.mxu0 %v104
    %392 = vmatprep.subr.mxu0 0.0
    %393 = vmatpush1.msra.mxu0 %v105
    %394 = vmatprep.subr.mxu0 0.0
    %395 = vmatpush1.msra.mxu0 %v106
    %396 = vmatprep.subr.mxu0 0.0
    %397 = vmatpush1.msra.mxu0 %v107
    %398 = vmatprep.subr.mxu0 0.0
    %399 = vmatpush1.msra.mxu0 %v108
    %400 = vmatprep.subr.mxu0 0.0
    %401 = vmatpush1.msra.mxu0 %v109
    %402 = vmatprep.subr.mxu0 0.0
    %403 = vmatpush1.msra.mxu0 %v110
    %404 = vmatprep.subr.mxu0 0.0
    %405 = vmatpush1.msra.mxu0 %v111
    %406 = vmatprep.subr.mxu0 0.0
    %407 = vmatpush1.msra.mxu0 %v112
    %408 = vmatprep.subr.mxu0 0.0
    %409 = vmatpush1.msra.mxu0 %v113
    %410 = vmatprep.subr.mxu0 0.0
    %411 = vmatpush1.msra.mxu0 %v114
    %412 = vmatprep.subr.mxu0 0.0
    %413 = vmatpush1.msra.mxu0 %v115
    %414 = vmatprep.subr.mxu0 0.0
    %415 = vmatpush1.msra.mxu0 %v116
    %416 = vmatprep.subr.mxu0 0.0
    %417 = vmatpush1.msra.mxu0 %v117
    %418 = vmatprep.subr.mxu0 0.0
    %419 = vmatpush1.msra.mxu0 %v118
    %420 = vmatprep.mubr.f32.mxu0 %v205
    %421 = vmatmul.mubr.f32.gmra.mrb[0].mxu0 %v204
    %v422 = vpop.f32.mrb[0].mxu0
    %v423 = vadd.f32 %v353, %v422
    %v424 = vpop.f32.mrb[0].mxu0
    %425 = vdwg.mxu0
    %426 = vmatprep.subr.mxu0 0.0
    %427 = vmatpush1.msra.mxu0 %v119
    %428 = vmatprep.subr.mxu0 0.0
    %429 = vmatpush1.msra.mxu0 %v120
    %430 = vmatprep.subr.mxu0 0.0
    %431 = vmatpush1.msra.mxu0 0.0
    %432 = vmatprep.subr.mxu0 0.0
    %433 = vmatpush1.msra.mxu0 0.0
    %434 = vmatprep.subr.mxu0 0.0
    %435 = vmatpush1.msra.mxu0 0.0
    %436 = vmatprep.subr.mxu0 0.0
    %437 = vmatpush1.msra.mxu0 0.0
    %438 = vmatprep.subr.mxu0 0.0
    %439 = vmatpush1.msra.mxu0 0.0
    %440 = vmatprep.subr.mxu0 0.0
    %441 = vmatpush1.msra.mxu0 0.0
    %442 = vmatprep.subr.mxu0 0.0
    %443 = vmatpush1.msra.mxu0 0.0
    %444 = vmatprep.subr.mxu0 0.0
    %445 = vmatpush1.msra.mxu0 0.0
    %446 = vmatprep.subr.mxu0 0.0
    %447 = vmatpush1.msra.mxu0 0.0
    %448 = vmatprep.subr.mxu0 0.0
    %449 = vmatpush1.msra.mxu0 0.0
    %450 = vmatprep.subr.mxu0 0.0
    %451 = vmatpush1.msra.mxu0 0.0
    %452 = vmatprep.subr.mxu0 0.0
    %453 = vmatpush1.msra.mxu0 0.0
    %454 = vmatprep.subr.mxu0 0.0
    %455 = vmatpush1.msra.mxu0 0.0
    %456 = vmatprep.subr.mxu0 0.0
    %457 = vmatpush1.msra.mxu0 0.0
    %458 = vmatprep.subr.mxu0 0.0
    %459 = vmatpush1.msra.mxu0 0.0
    %460 = vmatprep.subr.mxu0 0.0
    %461 = vmatpush1.msra.mxu0 0.0
    %462 = vmatprep.subr.mxu0 0.0
    %463 = vmatpush1.msra.mxu0 0.0
    %464 = vmatprep.subr.mxu0 0.0
    %465 = vmatpush1.msra.mxu0 0.0
    %466 = vmatprep.subr.mxu0 0.0
    %467 = vmatpush1.msra.mxu0 0.0
    %468 = vmatprep.subr.mxu0 0.0
    %469 = vmatpush1.msra.mxu0 0.0
    %470 = vmatprep.subr.mxu0 0.0
    %471 = vmatpush1.msra.mxu0 0.0
    %472 = vmatprep.subr.mxu0 0.0
    %473 = vmatpush1.msra.mxu0 0.0
    %474 = vmatprep.subr.mxu0 0.0
    %475 = vmatpush1.msra.mxu0 0.0
    %476 = vmatprep.subr.mxu0 0.0
    %477 = vmatpush1.msra.mxu0 0.0
    %478 = vmatprep.subr.mxu0 0.0
    %479 = vmatpush1.msra.mxu0 0.0
    %480 = vmatprep.subr.mxu0 0.0
    %481 = vmatpush1.msra.mxu0 0.0
    %482 = vmatprep.subr.mxu0 0.0
    %483 = vmatpush1.msra.mxu0 0.0
    %484 = vmatprep.subr.mxu0 0.0
    %485 = vmatpush1.msra.mxu0 0.0
    %486 = vmatprep.subr.mxu0 0.0
    %487 = vmatpush1.msra.mxu0 0.0
    %488 = vmatprep.subr.mxu0 0.0
    %489 = vmatpush1.msra.mxu0 0.0
    %490 = vmatprep.mubr.f32.mxu0 0.0
    %491 = vmatmul.mubr.f32.gmra.mrb[0].mxu0 %v214
    %v492 = vpop.f32.mrb[0].mxu0
    %v493 = vadd.f32 %v423, %v492
    %v494 = vpop.f32.mrb[0].mxu0
    %495 = vdwg.mxu0
    %vm496 = vcmask 80896
    %497 = vst.msk [vmem:[#allocation2] sm:$0xff] %vm496, %v493
    // Predicated region
    $region14: #{tpu_custom_call.1} parent=1 // pred_check
      _
    $region15: #{tpu_custom_call.1} parent=1 // pred_check_branch
      %499 = sbr.rel (0) target = $region17
    $region16: #{tpu_custom_call.1} parent=1 // pred_region
      %s501 = ssub.s32 128, 32
      %502 = vsyncadd [#allocation3], %s501
      %s503 = sshll.u32 [#allocation2], 4
      %s504 = int_to_ptr.vmem [resolvable:$true] %s503
      %509 = dma.vmem_to_hbm [thread:$0]  %s504, 32, %s3, [#allocation3], 32, 32, 2
    $region17: #{tpu_custom_call.1} parent=1 // pred_fallthru
      _
    // Predicated region
    $region18: #{tpu_custom_call.1} parent=1 // pred_check
      _
    $region19: #{tpu_custom_call.1} parent=1 // pred_check_branch
      %511 = sbr.rel (0) target = $region21
    $region20: #{tpu_custom_call.1} parent=1 // pred_region
      %512 = dma.done [#allocation3], 128
    $region21: #{tpu_custom_call.1} parent=1 // pred_fallthru
      _
    %513 = vsyncpa [#allocation3], 1

</llo_original>
